<compile_context>
chip_gen: v7x
topology: tpu7x:2x2x1
jax: 0.10.0
libtpu: 0.0.40
codegen_flags: <defaults>
</compile_context>

<pallas_src>
import jax
import jax.numpy as jnp
from jax.experimental import pallas as pl
from jax.experimental.pallas import tpu as pltpu


def _round_up(n, m):
    return ((n + m - 1) // m) * m


def _nbytes(a):
    return a.size * jnp.dtype(a.dtype).itemsize


# --------------------------------------------------------------------------- #
# Kernel: whole 4-layer MLP on one activation tile; weights resident in VMEM.
# --------------------------------------------------------------------------- #
def dqn_kernel(x_ref, w1_ref, b1_ref, w2_ref, b2_ref, w3_ref, b3_ref,
               w4_ref, b4_ref, o_ref):
    # Layer 1: Linear(n_obs -> 256) + ReLU, fully f32 (exact on raw observations).
    h = jnp.dot(x_ref[...], w1_ref[...],
                preferred_element_type=jnp.float32) + b1_ref[...]
    h = jnp.maximum(h, 0.0)

    # Layer 2: Linear(256 -> 256) + ReLU   (bf16 operands, f32 accumulation).
    w2 = w2_ref[...]
    h = jnp.dot(h.astype(w2.dtype), w2,
                preferred_element_type=jnp.float32) + b2_ref[...]
    h = jnp.maximum(h, 0.0)

    # Layer 3: Linear(256 -> 128) + ReLU.
    w3 = w3_ref[...]
    h = jnp.dot(h.astype(w3.dtype), w3,
                preferred_element_type=jnp.float32) + b3_ref[...]
    h = jnp.maximum(h, 0.0)

    # Layer 4: Linear(128 -> n_actions), no activation.  Output block carries
    # only the n_actions live lanes (masked store, far fewer bytes than padding).
    w4 = w4_ref[...]
    out = jnp.dot(h.astype(w4.dtype), w4,
                  preferred_element_type=jnp.float32) + b4_ref[...]
    o_ref[...] = out.astype(o_ref.dtype)


# --------------------------------------------------------------------------- #
# One-time parameter prep (hoisted out of the forward): layers 2-4 pre-cast to
# bf16, layer 1 and all biases kept f32.  Do this once per optimizer step.
# --------------------------------------------------------------------------- #
def prepare_dqn_params(params, matmul_dtype=jnp.bfloat16):
    (w1, b1), (w2, b2), (w3, b3), (w4, b4) = params
    f32 = jnp.float32
    return (
        (w1.astype(f32), b1.astype(f32)),
        (w2.astype(matmul_dtype), b2.astype(f32)),
        (w3.astype(matmul_dtype), b3.astype(f32)),
        (w4.astype(matmul_dtype), b4.astype(f32)),
    )


def dqn_forward(x, prepped_params):
    """x: (B, *obs_shape) -> flattened to (B, n_obs). Returns (B, n_actions) f32."""
    B = x.shape[0]
    x2d = x.reshape(B, -1)                      # x.flatten(start_dim=1)
    if x2d.dtype != jnp.float32:
        x2d = x2d.astype(jnp.float32)
    (w1, b1), (w2, b2), (w3, b3), (w4, b4) = prepped_params
    n_obs = x2d.shape[1]
    n_actions = w4.shape[1]

    # ---- Batch tiling --------------------------------------------------------
    if B <= 32:
        # Latency path (action selection): single block, rows padded to 16
        # (bf16 sublane pack).  Never split across TCs: that would just
        # duplicate the ~0.3 MiB weight DMA.
        B_p = _round_up(max(B, 1), 16)
        tile_b = B_p
    else:
        # Throughput path (replay-batch training): exactly 2 blocks.  Feeds
        # both TensorCores on v7x; on single-TC v5e/v6e the extra grid step
        # costs well under a microsecond.
        B_p = _round_up(B, 32)
        tile_b = B_p // 2
    if B_p != B:
        x2d = jnp.pad(x2d, ((0, B_p - B), (0, 0)))
    grid = (B_p // tile_b,)

    def _resident(a):
        # Full-array block with a constant index_map -> DMA'd once, stays
        # resident in VMEM across all batch tiles.
        return pl.BlockSpec(a.shape, lambda i: (0, 0))

    weights = (w1, b1, w2, b2, w3, b3, w4, b4)
    flops = 2 * B_p * (n_obs * 256 + 256 * 256 + 256 * 128 + 128 * n_actions)
    bytes_accessed = (_nbytes(x2d) + sum(_nbytes(w) for w in weights)
                      + B_p * n_actions * 4)

    out = pl.pallas_call(
        dqn_kernel,
        out_shape=jax.ShapeDtypeStruct((B_p, n_actions), jnp.float32),
        grid=grid,
        in_specs=[
            pl.BlockSpec((tile_b, n_obs), lambda i: (i, 0)),   # x: streamed
            _resident(w1), _resident(b1),
            _resident(w2), _resident(b2),
            _resident(w3), _resident(b3),
            _resident(w4), _resident(b4),
        ],
        out_specs=pl.BlockSpec((tile_b, n_actions), lambda i: (i, 0)),
        compiler_params=pltpu.CompilerParams(
            dimension_semantics=("parallel",),   # 2 TCs on v7x; no-op on v5e/v6e
        ),
        cost_estimate=pl.CostEstimate(
            flops=flops, transcendentals=0, bytes_accessed=bytes_accessed),
    )(x2d, *weights)

    # TODO(synk): fuse the consumer (argmax for action selection / Q(s,a) gather
    # for the TD loss) into the kernel epilogue to also drop this batch slice.
    if B_p != B:
        out = out[:B]
    return out


# --------------------------------------------------------------------------- #
# PyTorch-equivalent init and a pure-JAX reference for verification.
# --------------------------------------------------------------------------- #
def init_linear(key, fan_in, fan_out):
    """PyTorch nn.Linear default init: U(-1/sqrt(fan_in), 1/sqrt(fan_in))."""
    kw, kb = jax.random.split(key)
    bound = 1.0 / jnp.sqrt(float(fan_in))
    w = jax.random.uniform(kw, (fan_in, fan_out), jnp.float32, -bound, bound)
    b = jax.random.uniform(kb, (1, fan_out), jnp.float32, -bound, bound)
    return w, b


def init_dqn_params(key, n_observations, n_actions):
    k1, k2, k3, k4 = jax.random.split(key, 4)
    return (
        init_linear(k1, n_observations, 256),
        init_linear(k2, 256, 256),
        init_linear(k3, 256, 128),
        init_linear(k4, 128, n_actions),
    )


def _reference_forward(x, params):
    xr = x.reshape(x.shape[0], -1).astype(jnp.float32)
    (w1, b1), (w2, b2), (w3, b3), (w4, b4) = params
    h = jnp.maximum(xr @ w1 + b1, 0.0)
    h = jnp.maximum(h @ w2 + b2, 0.0)
    h = jnp.maximum(h @ w3 + b3, 0.0)
    return h @ w4 + b4


if __name__ == "__main__":
    key = jax.random.PRNGKey(0)
    k_x, k_xb, k_p = jax.random.split(key, 3)

    # Small example: observation shaped (4, 4, 4) -> n_observations = 64.
    obs_shape = (4, 4, 4)
    n_observations = 4 * 4 * 4
    n_actions = 4
    params = init_dqn_params(k_p, n_observations, n_actions)
    prepped = prepare_dqn_params(params)       # hoisted one-time cast

    # --- Small (latency) batch: single-block path ----------------------------
    x_small = jax.random.normal(k_x, (2,) + obs_shape, dtype=jnp.float32)
    out_small = dqn_forward(x_small, prepped)
    jax.block_until_ready(out_small)
    ref_small = _reference_forward(x_small, params)
    assert out_small.shape == (2, n_actions)
    # Layer 1 is exact f32; layers 2-4 use bf16 operands -> loose tolerance.
    assert jnp.allclose(out_small, ref_small, atol=5e-2, rtol=5e-2), \
        float(jnp.max(jnp.abs(out_small - ref_small)))

    # --- Training-size batch: 2-block grid path -------------------------------
    x_big = jax.random.normal(k_xb, (512,) + obs_shape, dtype=jnp.float32)
    out_big = dqn_forward(x_big, prepped)
    jax.block_until_ready(out_big)
    ref_big = _reference_forward(x_big, params)
    assert out_big.shape == (512, n_actions)
    assert jnp.allclose(out_big, ref_big, atol=5e-2, rtol=5e-2), \
        float(jnp.max(jnp.abs(out_big - ref_big)))

    print("KERNEL_OK")
</pallas_src>

<mosaic_0001>
module attributes {stable_mosaic.version = 11 : i64} {
  func.func @dqn_kernel(%arg0: i32, %arg1: memref<16x64xf32, #tpu.memory_space<vmem>>, %arg2: memref<64x256xf32, #tpu.memory_space<vmem>>, %arg3: memref<1x256xf32, #tpu.memory_space<vmem>>, %arg4: memref<256x256xbf16, #tpu.memory_space<vmem>>, %arg5: memref<1x256xf32, #tpu.memory_space<vmem>>, %arg6: memref<256x128xbf16, #tpu.memory_space<vmem>>, %arg7: memref<1x128xf32, #tpu.memory_space<vmem>>, %arg8: memref<128x4xbf16, #tpu.memory_space<vmem>>, %arg9: memref<1x4xf32, #tpu.memory_space<vmem>>, %arg10: memref<16x4xf32, #tpu.memory_space<vmem>>) attributes {dimension_semantics = [#tpu.dimension_semantics<parallel>], iteration_bounds = array<i64: 1>, scalar_prefetch = 0 : i64, scratch_operands = 0 : i64, tpu.core_type = #tpu.core_type<tc>, window_params = [{transform_indices = @transform_0, window_bounds = array<i64: 16, 64>}, {pipeline_mode = #tpu.pipeline_mode<synchronous>, transform_indices = @transform_1, window_bounds = array<i64: 64, 256>}, {pipeline_mode = #tpu.pipeline_mode<synchronous>, transform_indices = @transform_2, window_bounds = array<i64: 1, 256>}, {pipeline_mode = #tpu.pipeline_mode<synchronous>, transform_indices = @transform_3, window_bounds = array<i64: 256, 256>}, {pipeline_mode = #tpu.pipeline_mode<synchronous>, transform_indices = @transform_4, window_bounds = array<i64: 1, 256>}, {pipeline_mode = #tpu.pipeline_mode<synchronous>, transform_indices = @transform_5, window_bounds = array<i64: 256, 128>}, {pipeline_mode = #tpu.pipeline_mode<synchronous>, transform_indices = @transform_6, window_bounds = array<i64: 1, 128>}, {pipeline_mode = #tpu.pipeline_mode<synchronous>, transform_indices = @transform_7, window_bounds = array<i64: 128, 4>}, {pipeline_mode = #tpu.pipeline_mode<synchronous>, transform_indices = @transform_8, window_bounds = array<i64: 1, 4>}, {transform_indices = @transform_9, window_bounds = array<i64: 16, 4>}]} {
    %c0 = arith.constant 0 : index
    %c0_0 = arith.constant 0 : index
    %0 = vector.load %arg1[%c0, %c0_0] : memref<16x64xf32, #tpu.memory_space<vmem>>, vector<16x64xf32>
    %c0_1 = arith.constant 0 : index
    %c0_2 = arith.constant 0 : index
    %1 = vector.load %arg2[%c0_1, %c0_2] : memref<64x256xf32, #tpu.memory_space<vmem>>, vector<64x256xf32>
    %cst = arith.constant dense<0.000000e+00> : vector<16x256xf32>
    %2 = tpu.matmul %0, %1, %cst {dimension_numbers = #tpu.dot_dimension_numbers<[1], [0], [0], [1], [0, 0, 1, 1], [], []>} : vector<16x64xf32>, vector<64x256xf32>, vector<16x256xf32> -> vector<16x256xf32>
    %c0_3 = arith.constant 0 : index
    %c0_4 = arith.constant 0 : index
    %3 = vector.load %arg3[%c0_3, %c0_4] : memref<1x256xf32, #tpu.memory_space<vmem>>, vector<1x256xf32>
    %4 = vector.broadcast %3 : vector<1x256xf32> to vector<16x256xf32>
    %5 = arith.addf %2, %4 : vector<16x256xf32>
    %cst_5 = arith.constant 0.000000e+00 : f32
    %6 = vector.broadcast %cst_5 : f32 to vector<16x256xf32>
    %7 = arith.maximumf %5, %6 : vector<16x256xf32>
    %c0_6 = arith.constant 0 : index
    %c0_7 = arith.constant 0 : index
    %8 = vector.load %arg4[%c0_6, %c0_7] : memref<256x256xbf16, #tpu.memory_space<vmem>>, vector<256x256xbf16>
    %9 = arith.truncf %7 : vector<16x256xf32> to vector<16x256xbf16>
    %cst_8 = arith.constant dense<0.000000e+00> : vector<16x256xf32>
    %10 = tpu.matmul %9, %8, %cst_8 {dimension_numbers = #tpu.dot_dimension_numbers<[1], [0], [0], [1], [0, 0, 1, 1], [], []>} : vector<16x256xbf16>, vector<256x256xbf16>, vector<16x256xf32> -> vector<16x256xf32>
    %c0_9 = arith.constant 0 : index
    %c0_10 = arith.constant 0 : index
    %11 = vector.load %arg5[%c0_9, %c0_10] : memref<1x256xf32, #tpu.memory_space<vmem>>, vector<1x256xf32>
    %12 = vector.broadcast %11 : vector<1x256xf32> to vector<16x256xf32>
    %13 = arith.addf %10, %12 : vector<16x256xf32>
    %cst_11 = arith.constant 0.000000e+00 : f32
    %14 = vector.broadcast %cst_11 : f32 to vector<16x256xf32>
    %15 = arith.maximumf %13, %14 : vector<16x256xf32>
    %c0_12 = arith.constant 0 : index
    %c0_13 = arith.constant 0 : index
    %16 = vector.load %arg6[%c0_12, %c0_13] : memref<256x128xbf16, #tpu.memory_space<vmem>>, vector<256x128xbf16>
    %17 = arith.truncf %15 : vector<16x256xf32> to vector<16x256xbf16>
    %cst_14 = arith.constant dense<0.000000e+00> : vector<16x128xf32>
    %18 = tpu.matmul %17, %16, %cst_14 {dimension_numbers = #tpu.dot_dimension_numbers<[1], [0], [0], [1], [0, 0, 1, 1], [], []>} : vector<16x256xbf16>, vector<256x128xbf16>, vector<16x128xf32> -> vector<16x128xf32>
    %c0_15 = arith.constant 0 : index
    %c0_16 = arith.constant 0 : index
    %19 = vector.load %arg7[%c0_15, %c0_16] : memref<1x128xf32, #tpu.memory_space<vmem>>, vector<1x128xf32>
    %20 = vector.broadcast %19 : vector<1x128xf32> to vector<16x128xf32>
    %21 = arith.addf %18, %20 : vector<16x128xf32>
    %cst_17 = arith.constant 0.000000e+00 : f32
    %22 = vector.broadcast %cst_17 : f32 to vector<16x128xf32>
    %23 = arith.maximumf %21, %22 : vector<16x128xf32>
    %c0_18 = arith.constant 0 : index
    %c0_19 = arith.constant 0 : index
    %24 = vector.load %arg8[%c0_18, %c0_19] : memref<128x4xbf16, #tpu.memory_space<vmem>>, vector<128x4xbf16>
    %25 = arith.truncf %23 : vector<16x128xf32> to vector<16x128xbf16>
    %cst_20 = arith.constant dense<0.000000e+00> : vector<16x4xf32>
    %26 = tpu.matmul %25, %24, %cst_20 {dimension_numbers = #tpu.dot_dimension_numbers<[1], [0], [0], [1], [0, 0, 1, 1], [], []>} : vector<16x128xbf16>, vector<128x4xbf16>, vector<16x4xf32> -> vector<16x4xf32>
    %c0_21 = arith.constant 0 : index
    %c0_22 = arith.constant 0 : index
    %27 = vector.load %arg9[%c0_21, %c0_22] : memref<1x4xf32, #tpu.memory_space<vmem>>, vector<1x4xf32>
    %28 = vector.broadcast %27 : vector<1x4xf32> to vector<16x4xf32>
    %29 = arith.addf %26, %28 : vector<16x4xf32>
    %c0_23 = arith.constant 0 : index
    %c0_24 = arith.constant 0 : index
    %30 = vector.load %arg10[%c0_23, %c0_24] : memref<16x4xf32, #tpu.memory_space<vmem>>, vector<16x4xf32>
    tpu.vector_store %arg10[%c0_23, %c0_24], %29 {strides = array<i32>} : memref<16x4xf32, #tpu.memory_space<vmem>>, vector<16x4xf32>,
    return
  }
  func.func @transform_0(%arg0: i32) -> (i32, i32) {
    %c0_i32 = arith.constant 0 : i32
    %c0_i32_0 = arith.constant 0 : i32
    return %arg0, %c0_i32 : i32, i32
  }
  func.func @transform_1(%arg0: i32) -> (i32, i32) {
    %c0_i32 = arith.constant 0 : i32
    %c0_i32_0 = arith.constant 0 : i32
    %c0_i32_1 = arith.constant 0 : i32
    return %c0_i32, %c0_i32_0 : i32, i32
  }
  func.func @transform_2(%arg0: i32) -> (i32, i32) {
    %c0_i32 = arith.constant 0 : i32
    %c0_i32_0 = arith.constant 0 : i32
    %c0_i32_1 = arith.constant 0 : i32
    return %c0_i32, %c0_i32_0 : i32, i32
  }
  func.func @transform_3(%arg0: i32) -> (i32, i32) {
    %c0_i32 = arith.constant 0 : i32
    %c0_i32_0 = arith.constant 0 : i32
    %c0_i32_1 = arith.constant 0 : i32
    return %c0_i32, %c0_i32_0 : i32, i32
  }
  func.func @transform_4(%arg0: i32) -> (i32, i32) {
    %c0_i32 = arith.constant 0 : i32
    %c0_i32_0 = arith.constant 0 : i32
    %c0_i32_1 = arith.constant 0 : i32
    return %c0_i32, %c0_i32_0 : i32, i32
  }
  func.func @transform_5(%arg0: i32) -> (i32, i32) {
    %c0_i32 = arith.constant 0 : i32
    %c0_i32_0 = arith.constant 0 : i32
    %c0_i32_1 = arith.constant 0 : i32
    return %c0_i32, %c0_i32_0 : i32, i32
  }
  func.func @transform_6(%arg0: i32) -> (i32, i32) {
    %c0_i32 = arith.constant 0 : i32
    %c0_i32_0 = arith.constant 0 : i32
    %c0_i32_1 = arith.constant 0 : i32
    return %c0_i32, %c0_i32_0 : i32, i32
  }
  func.func @transform_7(%arg0: i32) -> (i32, i32) {
    %c0_i32 = arith.constant 0 : i32
    %c0_i32_0 = arith.constant 0 : i32
    %c0_i32_1 = arith.constant 0 : i32
    return %c0_i32, %c0_i32_0 : i32, i32
  }
  func.func @transform_8(%arg0: i32) -> (i32, i32) {
    %c0_i32 = arith.constant 0 : i32
    %c0_i32_0 = arith.constant 0 : i32
    %c0_i32_1 = arith.constant 0 : i32
    return %c0_i32, %c0_i32_0 : i32, i32
  }
  func.func @transform_9(%arg0: i32) -> (i32, i32) {
    %c0_i32 = arith.constant 0 : i32
    %c0_i32_0 = arith.constant 0 : i32
    return %arg0, %c0_i32 : i32, i32
  }
}

</mosaic_0001>

<llo_original>
// kernel: tpu_custom_call.1
$region0: #{tpu_custom_call.1}
  #allocation0 [shape = 'u32[]', space=smem, size = 0x4, offset = 0x4, fixed_abs, tag = 'smem constant byte address 0x4 - core index']
  #allocation1 [shape = 'u32[144,128]{1,0:T(1,128)}', space=vmem, size = 0x12000, scoped, tag = 'internal scratch']
  %s0 = inlined_call_operand.vmem [shape: f32[16,64], index: 0, kind: input, shape index: {}]
  %s1 = inlined_call_operand.hbm [shape: f32[64,256], index: 1, kind: input, shape index: {}]
  %s2 = inlined_call_operand.vmem [shape: f32[1,256], index: 2, kind: input, shape index: {}]
  %s3 = inlined_call_operand.hbm [shape: bf16[256,256], index: 3, kind: input, shape index: {}]
  %s4 = inlined_call_operand.vmem [shape: f32[1,256], index: 4, kind: input, shape index: {}]
  %s5 = inlined_call_operand.hbm [shape: bf16[256,128], index: 5, kind: input, shape index: {}]
  %s6 = inlined_call_operand.vmem [shape: f32[1,128], index: 6, kind: input, shape index: {}]
  %s7 = inlined_call_operand.vmem [shape: bf16[128,4], index: 7, kind: input, shape index: {}]
  %s8 = inlined_call_operand.vmem [shape: f32[1,4], index: 8, kind: input, shape index: {}]
  %s9 = inlined_call_operand.vmem [shape: f32[16,4], index: 9, kind: output, shape index: {}]
  %s10 = sld [smem:[#allocation0]]
  $region58: #{tpu_custom_call.1} parent=0
    _
  %s12 = ssub.s32 1, %s10
  %s13 = scalar_select 0, %s12, %s10
  $region1: #{tpu_custom_call.1} parent=0
    #allocation2 [shape = 'u8[65536]{0}', space=vmem, size = 0x10000, scoped, tag = 'input window, operand 1, single buffered']
    #allocation3 [shape = 's32[1]{0}', space=sflag, size = 0x4, scoped, tag = 'scoped memory for tpu_custom_call.1']
    #allocation4 [shape = 'u8[131072]{0}', space=vmem, size = 0x20000, scoped, tag = 'input window, operand 3, single buffered']
    #allocation5 [shape = 's32[1]{0}', space=sflag, size = 0x4, scoped, tag = 'scoped memory for tpu_custom_call.1']
    #allocation6 [shape = 'u8[65536]{0}', space=vmem, size = 0x10000, scoped, tag = 'input window, operand 5, single buffered']
    %14 = vsyncpa [#allocation3], 0
    %15 = vsyncpa [#allocation5], 0
    // Predicated region
    $region2: #{tpu_custom_call.1} parent=1 // pred_check
      _
    $region3: #{tpu_custom_call.1} parent=1 // pred_check_branch
      %17 = sbr.rel (0) target = $region5
    $region4: #{tpu_custom_call.1} parent=1 // pred_region
      _
    $region5: #{tpu_custom_call.1} parent=1 // pred_fallthru
      _
    // Predicated region
    $region6: #{tpu_custom_call.1} parent=1 // pred_check
      _
    $region7: #{tpu_custom_call.1} parent=1 // pred_check_branch
      %19 = sbr.rel (0) target = $region9
    $region8: #{tpu_custom_call.1} parent=1 // pred_region
      %s21 = ssub.s32 2048, 2048
      %22 = vsyncadd [#allocation3], %s21
      %s23 = sshll.u32 [#allocation2], 4
      %s24 = int_to_ptr.vmem [resolvable:$true] %s23
      %29 = dma.hbm_to_vmem [thread:$0]  %s1, 2048, %s24, [#allocation3], 256, 256, 16
    $region9: #{tpu_custom_call.1} parent=1 // pred_fallthru
      _
    // Predicated region
    $region10: #{tpu_custom_call.1} parent=1 // pred_check
      _
    $region11: #{tpu_custom_call.1} parent=1 // pred_check_branch
      %31 = sbr.rel (0) target = $region13
    $region12: #{tpu_custom_call.1} parent=1 // pred_region
      _
    $region13: #{tpu_custom_call.1} parent=1 // pred_fallthru
      _
    // Predicated region
    $region14: #{tpu_custom_call.1} parent=1 // pred_check
      _
    $region15: #{tpu_custom_call.1} parent=1 // pred_check_branch
      %33 = sbr.rel (0) target = $region17
    $region16: #{tpu_custom_call.1} parent=1 // pred_region
      %s35 = ssub.s32 4096, 4096
      %36 = vsyncadd [#allocation5], %s35
      %s37 = sshll.u32 [#allocation4], 4
      %s38 = int_to_ptr.vmem [resolvable:$true] %s37
      %43 = dma.hbm_to_vmem [thread:$0]  %s3, 4096, %s38, [#allocation5], 128, 128, 8
    $region17: #{tpu_custom_call.1} parent=1 // pred_fallthru
      _
    // Predicated region
    $region18: #{tpu_custom_call.1} parent=1 // pred_check
      _
    $region19: #{tpu_custom_call.1} parent=1 // pred_check_branch
      %45 = sbr.rel (0) target = $region21
    $region20: #{tpu_custom_call.1} parent=1 // pred_region
      _
    $region21: #{tpu_custom_call.1} parent=1 // pred_fallthru
      _
    // Predicated region
    $region22: #{tpu_custom_call.1} parent=1 // pred_check
      _
    $region23: #{tpu_custom_call.1} parent=1 // pred_check_branch
      %47 = sbr.rel (0) target = $region25
    $region24: #{tpu_custom_call.1} parent=1 // pred_region
      %s49 = ssub.s32 2048, 2048
      %50 = vsyncadd [#allocation5], %s49
      %s51 = sshll.u32 [#allocation6], 4
      %s52 = int_to_ptr.vmem [resolvable:$true] %s51
      %57 = dma.hbm_to_vmem [thread:$0]  %s5, 2048, %s52, [#allocation5], 64, 64, 4
    $region25: #{tpu_custom_call.1} parent=1 // pred_fallthru
      _
    // Predicated region
    $region26: #{tpu_custom_call.1} parent=1 // pred_check
      _
    $region27: #{tpu_custom_call.1} parent=1 // pred_check_branch
      %59 = sbr.rel (0) target = $region29
    $region28: #{tpu_custom_call.1} parent=1 // pred_region
      _
    $region29: #{tpu_custom_call.1} parent=1 // pred_fallthru
      _
    // Predicated region
    $region30: #{tpu_custom_call.1} parent=1 // pred_check
      _
    $region31: #{tpu_custom_call.1} parent=1 // pred_check_branch
      %61 = sbr.rel (0) target = $region33
    $region32: #{tpu_custom_call.1} parent=1 // pred_region
      _
    $region33: #{tpu_custom_call.1} parent=1 // pred_fallthru
      _
    // Predicated region
    $region34: #{tpu_custom_call.1} parent=1 // pred_check
      _
    $region35: #{tpu_custom_call.1} parent=1 // pred_check_branch
      %63 = sbr.rel (0) target = $region37
    $region36: #{tpu_custom_call.1} parent=1 // pred_region
      _
    $region37: #{tpu_custom_call.1} parent=1 // pred_fallthru
      _
    // Predicated region
    $region38: #{tpu_custom_call.1} parent=1 // pred_check
      _
    $region39: #{tpu_custom_call.1} parent=1 // pred_check_branch
      %65 = sbr.rel (0) target = $region41
    $region40: #{tpu_custom_call.1} parent=1 // pred_region
      %66 = dma.done [#allocation3], 2048
    $region41: #{tpu_custom_call.1} parent=1 // pred_fallthru
      _
    // Predicated region
    $region42: #{tpu_custom_call.1} parent=1 // pred_check
      _
    $region43: #{tpu_custom_call.1} parent=1 // pred_check_branch
      %68 = sbr.rel (0) target = $region45
    $region44: #{tpu_custom_call.1} parent=1 // pred_region
      %69 = dma.done [#allocation5], 4096
    $region45: #{tpu_custom_call.1} parent=1 // pred_fallthru
      _
    // Predicated region
    $region46: #{tpu_custom_call.1} parent=1 // pred_check
      _
    $region47: #{tpu_custom_call.1} parent=1 // pred_check_branch
      %71 = sbr.rel (0) target = $region49
    $region48: #{tpu_custom_call.1} parent=1 // pred_region
      %72 = dma.done [#allocation5], 2048
    $region49: #{tpu_custom_call.1} parent=1 // pred_fallthru
      _
    %v74 = vld [vmem:[%s0] sm:$0xff]
    %v75 = vld [vmem:[%s0 + $0x8] sm:$0xff]
    %v76 = vld [vmem:[#allocation2] sm:$0xff]
    %v77 = vld [vmem:[#allocation2 + $0x8] sm:$0xff]
    %v78 = vld [vmem:[#allocation2 + $0x10] sm:$0xff]
    %v79 = vld [vmem:[#allocation2 + $0x18] sm:$0xff]
    %v80 = vld [vmem:[#allocation2 + $0x20] sm:$0xff]
    %v81 = vld [vmem:[#allocation2 + $0x28] sm:$0xff]
    %v82 = vld [vmem:[#allocation2 + $0x30] sm:$0xff]
    %v83 = vld [vmem:[#allocation2 + $0x38] sm:$0xff]
    %v84 = vld [vmem:[#allocation2 + $0x40] sm:$0xff]
    %v85 = vld [vmem:[#allocation2 + $0x48] sm:$0xff]
    %v86 = vld [vmem:[#allocation2 + $0x50] sm:$0xff]
    %v87 = vld [vmem:[#allocation2 + $0x58] sm:$0xff]
    %v88 = vld [vmem:[#allocation2 + $0x60] sm:$0xff]
    %v89 = vld [vmem:[#allocation2 + $0x68] sm:$0xff]
    %v90 = vld [vmem:[#allocation2 + $0x70] sm:$0xff]
    %v91 = vld [vmem:[#allocation2 + $0x78] sm:$0xff]
    %v92 = vld [vmem:[%s2] sm:$0x3]
    %v94 = vlaneseq
    %v95 = vshrl.u32 %v94, 7
    %v96 = vsub.s32 0, %v95
    %v97 = vrot.slane %v92, %v96
    %v98 = vlaneseq
    %v99 = vshrl.u32 %v98, 7
    %v100 = vsub.s32 1, %v99
    %v101 = vrot.slane %v92, %v100
    %vm104 = vcmask 523264
    %v106 = vsel %vm104, %v74, 0
    %v109 = vsel %vm104, %v75, 0
    %111 = vmatprep.subr.mxu0 %v77
    %112 = vmatpush1.msra.mxu0 %v76
    %113 = vmatprep.subr.mxu0 %v79
    %114 = vmatpush1.msra.mxu0 %v78
    %115 = vmatprep.subr.mxu0 %v81
    %116 = vmatpush1.msra.mxu0 %v80
    %117 = vmatprep.subr.mxu0 %v83
    %118 = vmatpush1.msra.mxu0 %v82
    %119 = vmatprep.subr.mxu0 %v85
    %120 = vmatpush1.msra.mxu0 %v84
    %121 = vmatprep.subr.mxu0 %v87
    %122 = vmatpush1.msra.mxu0 %v86
    %123 = vmatprep.subr.mxu0 %v89
    %124 = vmatpush1.msra.mxu0 %v88
    %125 = vmatprep.subr.mxu0 %v91
    %126 = vmatpush1.msra.mxu0 %v90
    %127 = vmatprep.subr.mxu0 0.0
    %128 = vmatpush1.msra.mxu0 0.0
    %129 = vmatprep.subr.mxu0 0.0
    %130 = vmatpush1.msra.mxu0 0.0
    %131 = vmatprep.subr.mxu0 0.0
    %132 = vmatpush1.msra.mxu0 0.0
    %133 = vmatprep.subr.mxu0 0.0
    %134 = vmatpush1.msra.mxu0 0.0
    %135 = vmatprep.subr.mxu0 0.0
    %136 = vmatpush1.msra.mxu0 0.0
    %137 = vmatprep.subr.mxu0 0.0
    %138 = vmatpush1.msra.mxu0 0.0
    %139 = vmatprep.subr.mxu0 0.0
    %140 = vmatpush1.msra.mxu0 0.0
    %141 = vmatprep.subr.mxu0 0.0
    %142 = vmatpush1.msra.mxu0 0.0
    %143 = vmatprep.subr.mxu0 0.0
    %144 = vmatpush1.msra.mxu0 0.0
    %145 = vmatprep.subr.mxu0 0.0
    %146 = vmatpush1.msra.mxu0 0.0
    %147 = vmatprep.subr.mxu0 0.0
    %148 = vmatpush1.msra.mxu0 0.0
    %149 = vmatprep.subr.mxu0 0.0
    %150 = vmatpush1.msra.mxu0 0.0
    %151 = vmatprep.subr.mxu0 0.0
    %152 = vmatpush1.msra.mxu0 0.0
    %153 = vmatprep.subr.mxu0 0.0
    %154 = vmatpush1.msra.mxu0 0.0
    %155 = vmatprep.subr.mxu0 0.0
    %156 = vmatpush1.msra.mxu0 0.0
    %157 = vmatprep.subr.mxu0 0.0
    %158 = vmatpush1.msra.mxu0 0.0
    %159 = vmatprep.subr.mxu0 0.0
    %160 = vmatpush1.msra.mxu0 0.0
    %161 = vmatprep.subr.mxu0 0.0
    %162 = vmatpush1.msra.mxu0 0.0
    %163 = vmatprep.subr.mxu0 0.0
    %164 = vmatpush1.msra.mxu0 0.0
    %165 = vmatprep.subr.mxu0 0.0
    %166 = vmatpush1.msra.mxu0 0.0
    %167 = vmatprep.subr.mxu0 0.0
    %168 = vmatpush1.msra.mxu0 0.0
    %169 = vmatprep.subr.mxu0 0.0
    %170 = vmatpush1.msra.mxu0 0.0
    %171 = vmatprep.subr.mxu0 0.0
    %172 = vmatpush1.msra.mxu0 0.0
    %173 = vmatprep.subr.mxu0 0.0
    %174 = vmatpush1.msra.mxu0 0.0
    %175 = vmatprep.mubr.f32.mxu0 0.0
    %176 = vmatmul.mubr.f32.gmra.mrb[0].mxu0 %v106
    %v177 = vpop.f32.mrb[0].mxu0
    %v178 = vadd.f32 %v97, %v177
    %v179 = vpop.f32.mrb[0].mxu0
    %v180 = vadd.f32 %v101, %v179
    %181 = vmatprep.mubr.f32.mxu0 0.0
    %182 = vmatmul.mubr.f32.gmra.mrb[0].mxu0 %v109
    %v183 = vpop.f32.mrb[0].mxu0
    %v184 = vadd.f32 %v97, %v183
    %v185 = vpop.f32.mrb[0].mxu0
    %v186 = vadd.f32 %v101, %v185
    %187 = vdwg.mxu0
    %v188 = vmax.f32 %v178, 0.0
    %v189 = vmax.f32 %v180, 0.0
    %v190 = vmax.f32 %v184, 0.0
    %v191 = vmax.f32 %v186, 0.0
    %v192 = vld [vmem:[#allocation4] sm:$0xff]
    %v193 = vld [vmem:[#allocation4 + $0x8] sm:$0xff]
    %v194 = vld [vmem:[#allocation4 + $0x10] sm:$0xff]
    %v195 = vld [vmem:[#allocation4 + $0x18] sm:$0xff]
    %v196 = vld [vmem:[#allocation4 + $0x20] sm:$0xff]
    %v197 = vld [vmem:[#allocation4 + $0x28] sm:$0xff]
    %v198 = vld [vmem:[#allocation4 + $0x30] sm:$0xff]
    %v199 = vld [vmem:[#allocation4 + $0x38] sm:$0xff]
    %v200 = vld [vmem:[#allocation4 + $0x40] sm:$0xff]
    %v201 = vld [vmem:[#allocation4 + $0x48] sm:$0xff]
    %v202 = vld [vmem:[#allocation4 + $0x50] sm:$0xff]
    %v203 = vld [vmem:[#allocation4 + $0x58] sm:$0xff]
    %v204 = vld [vmem:[#allocation4 + $0x60] sm:$0xff]
    %v205 = vld [vmem:[#allocation4 + $0x68] sm:$0xff]
    %v206 = vld [vmem:[#allocation4 + $0x70] sm:$0xff]
    %v207 = vld [vmem:[#allocation4 + $0x78] sm:$0xff]
    %v208 = vld [vmem:[#allocation4 + $0x80] sm:$0xff]
    %v209 = vld [vmem:[#allocation4 + $0x88] sm:$0xff]
    %v210 = vld [vmem:[#allocation4 + $0x90] sm:$0xff]
    %v211 = vld [vmem:[#allocation4 + $0x98] sm:$0xff]
    %v212 = vld [vmem:[#allocation4 + $0xa0] sm:$0xff]
    %v213 = vld [vmem:[#allocation4 + $0xa8] sm:$0xff]
    %v214 = vld [vmem:[#allocation4 + $0xb0] sm:$0xff]
    %v215 = vld [vmem:[#allocation4 + $0xb8] sm:$0xff]
    %v216 = vld [vmem:[#allocation4 + $0xc0] sm:$0xff]
    %v217 = vld [vmem:[#allocation4 + $0xc8] sm:$0xff]
    %v218 = vld [vmem:[#allocation4 + $0xd0] sm:$0xff]
    %v219 = vld [vmem:[#allocation4 + $0xd8] sm:$0xff]
    %v220 = vld [vmem:[#allocation4 + $0xe0] sm:$0xff]
    %v221 = vld [vmem:[#allocation4 + $0xe8] sm:$0xff]
    %v222 = vld [vmem:[#allocation4 + $0xf0] sm:$0xff]
    %v223 = vld [vmem:[#allocation4 + $0xf8] sm:$0xff]
    %v224 = vpack.c.bf16 %v190, %v188
    %v225 = vpack.c.bf16 %v191, %v189
    %v226 = vld [vmem:[%s4] sm:$0x3]
    %v228 = vlaneseq
    %v229 = vshrl.u32 %v228, 7
    %v230 = vsub.s32 0, %v229
    %v231 = vrot.slane %v226, %v230
    %v232 = vlaneseq
    %v233 = vshrl.u32 %v232, 7
    %v234 = vsub.s32 1, %v233
    %v235 = vrot.slane %v226, %v234
    %v270 = vunpack.c.l.b16 %v192
    %v271 = vunpack.c.h.b16 %v192
    %v272 = vunpack.c.l.b16 %v193
    %v273 = vunpack.c.h.b16 %v193
    %v274 = vunpack.c.l.b16 %v194
    %v275 = vunpack.c.h.b16 %v194
    %v276 = vunpack.c.l.b16 %v195
    %v277 = vunpack.c.h.b16 %v195
    %v278 = vunpack.c.l.b16 %v196
    %v279 = vunpack.c.h.b16 %v196
    %v280 = vunpack.c.l.b16 %v197
    %v281 = vunpack.c.h.b16 %v197
    %v282 = vunpack.c.l.b16 %v198
    %v283 = vunpack.c.h.b16 %v198
    %v284 = vunpack.c.l.b16 %v199
    %v285 = vunpack.c.h.b16 %v199
    %v286 = vunpack.c.l.b16 %v200
    %v287 = vunpack.c.h.b16 %v200
    %v288 = vunpack.c.l.b16 %v201
    %v289 = vunpack.c.h.b16 %v201
    %v290 = vunpack.c.l.b16 %v202
    %v291 = vunpack.c.h.b16 %v202
    %v292 = vunpack.c.l.b16 %v203
    %v293 = vunpack.c.h.b16 %v203
    %v294 = vunpack.c.l.b16 %v204
    %v295 = vunpack.c.h.b16 %v204
    %v296 = vunpack.c.l.b16 %v205
    %v297 = vunpack.c.h.b16 %v205
    %v298 = vunpack.c.l.b16 %v206
    %v299 = vunpack.c.h.b16 %v206
    %v300 = vunpack.c.l.b16 %v207
    %v301 = vunpack.c.h.b16 %v207
    %v302 = vunpack.c.l.b16 %v208
    %v303 = vunpack.c.h.b16 %v208
    %v304 = vunpack.c.l.b16 %v209
    %v305 = vunpack.c.h.b16 %v209
    %v306 = vunpack.c.l.b16 %v210
    %v307 = vunpack.c.h.b16 %v210
    %v308 = vunpack.c.l.b16 %v211
    %v309 = vunpack.c.h.b16 %v211
    %v310 = vunpack.c.l.b16 %v212
    %v311 = vunpack.c.h.b16 %v212
    %v312 = vunpack.c.l.b16 %v213
    %v313 = vunpack.c.h.b16 %v213
    %v314 = vunpack.c.l.b16 %v214
    %v315 = vunpack.c.h.b16 %v214
    %v316 = vunpack.c.l.b16 %v215
    %v317 = vunpack.c.h.b16 %v215
    %v318 = vunpack.c.l.b16 %v216
    %v319 = vunpack.c.h.b16 %v216
    %v320 = vunpack.c.l.b16 %v217
    %v321 = vunpack.c.h.b16 %v217
    %v322 = vunpack.c.l.b16 %v218
    %v323 = vunpack.c.h.b16 %v218
    %v324 = vunpack.c.l.b16 %v219
    %v325 = vunpack.c.h.b16 %v219
    %v326 = vunpack.c.l.b16 %v220
    %v327 = vunpack.c.h.b16 %v220
    %v328 = vunpack.c.l.b16 %v221
    %v329 = vunpack.c.h.b16 %v221
    %v330 = vunpack.c.l.b16 %v222
    %v331 = vunpack.c.h.b16 %v222
    %v332 = vunpack.c.l.b16 %v223
    %v333 = vunpack.c.h.b16 %v223
    %v334 = vpack.c.b16 %v272, %v270
    %v335 = vpack.c.b16 %v273, %v271
    %v336 = vpack.c.b16 %v276, %v274
    %v337 = vpack.c.b16 %v277, %v275
    %v338 = vpack.c.b16 %v280, %v278
    %v339 = vpack.c.b16 %v281, %v279
    %v340 = vpack.c.b16 %v284, %v282
    %v341 = vpack.c.b16 %v285, %v283
    %v342 = vpack.c.b16 %v288, %v286
    %v343 = vpack.c.b16 %v289, %v287
    %v344 = vpack.c.b16 %v292, %v290
    %v345 = vpack.c.b16 %v293, %v291
    %v346 = vpack.c.b16 %v296, %v294
    %v347 = vpack.c.b16 %v297, %v295
    %v348 = vpack.c.b16 %v300, %v298
    %v349 = vpack.c.b16 %v301, %v299
    %v350 = vpack.c.b16 %v304, %v302
    %v351 = vpack.c.b16 %v305, %v303
    %v352 = vpack.c.b16 %v308, %v306
    %v353 = vpack.c.b16 %v309, %v307
    %v354 = vpack.c.b16 %v312, %v310
    %v355 = vpack.c.b16 %v313, %v311
    %v356 = vpack.c.b16 %v316, %v314
    %v357 = vpack.c.b16 %v317, %v315
    %v358 = vpack.c.b16 %v320, %v318
    %v359 = vpack.c.b16 %v321, %v319
    %v360 = vpack.c.b16 %v324, %v322
    %v361 = vpack.c.b16 %v325, %v323
    %v362 = vpack.c.b16 %v328, %v326
    %v363 = vpack.c.b16 %v329, %v327
    %v364 = vpack.c.b16 %v332, %v330
    %v365 = vpack.c.b16 %v333, %v331
    %398 = vmatprep.subr.bf16.mxu0 %v335
    %399 = vmatpush1.bf16.msra.mxu0 %v334
    %400 = vmatprep.subr.bf16.mxu0 %v337
    %401 = vmatpush1.bf16.msra.mxu0 %v336
    %402 = vmatprep.subr.bf16.mxu0 %v339
    %403 = vmatpush1.bf16.msra.mxu0 %v338
    %404 = vmatprep.subr.bf16.mxu0 %v341
    %405 = vmatpush1.bf16.msra.mxu0 %v340
    %406 = vmatprep.subr.bf16.mxu0 %v343
    %407 = vmatpush1.bf16.msra.mxu0 %v342
    %408 = vmatprep.subr.bf16.mxu0 %v345
    %409 = vmatpush1.bf16.msra.mxu0 %v344
    %410 = vmatprep.subr.bf16.mxu0 %v347
    %411 = vmatpush1.bf16.msra.mxu0 %v346
    %412 = vmatprep.subr.bf16.mxu0 %v349
    %413 = vmatpush1.bf16.msra.mxu0 %v348
    %414 = vmatprep.subr.bf16.mxu0 %v351
    %415 = vmatpush1.bf16.msra.mxu0 %v350
    %416 = vmatprep.subr.bf16.mxu0 %v353
    %417 = vmatpush1.bf16.msra.mxu0 %v352
    %418 = vmatprep.subr.bf16.mxu0 %v355
    %419 = vmatpush1.bf16.msra.mxu0 %v354
    %420 = vmatprep.subr.bf16.mxu0 %v357
    %421 = vmatpush1.bf16.msra.mxu0 %v356
    %422 = vmatprep.subr.bf16.mxu0 %v359
    %423 = vmatpush1.bf16.msra.mxu0 %v358
    %424 = vmatprep.subr.bf16.mxu0 %v361
    %425 = vmatpush1.bf16.msra.mxu0 %v360
    %426 = vmatprep.subr.bf16.mxu0 %v363
    %427 = vmatpush1.bf16.msra.mxu0 %v362
    %428 = vmatprep.subr.bf16.mxu0 %v365
    %429 = vmatpush1.bf16.msra.mxu0 %v364
    %430 = vmatprep.mubr.bf16.mxu0 %v225
    %431 = vmatmul.mubr.bf16.gmra.mrb[0].mxu0 %v224
    %v432 = vpop.f32.mrb[0].mxu0
    %v433 = vadd.f32 %v231, %v432
    %v434 = vpop.f32.mrb[0].mxu0
    %v435 = vadd.f32 %v235, %v434
    %v436 = vpop.f32.mrb[0].mxu0
    %v437 = vadd.f32 %v231, %v436
    %v438 = vpop.f32.mrb[0].mxu0
    %v439 = vadd.f32 %v235, %v438
    %440 = vdwg.mxu0
    %v441 = vmax.f32 %v433, 0.0
    %v442 = vmax.f32 %v435, 0.0
    %v443 = vmax.f32 %v437, 0.0
    %v444 = vmax.f32 %v439, 0.0
    %v445 = vld [vmem:[#allocation6] sm:$0xf]
    %v446 = vld [vmem:[#allocation6 + $0x4] sm:$0xf]
    %v447 = vld [vmem:[#allocation6 + $0x8] sm:$0xf]
    %v448 = vld [vmem:[#allocation6 + $0xc] sm:$0xf]
    %v449 = vld [vmem:[#allocation6 + $0x10] sm:$0xf]
    %v450 = vld [vmem:[#allocation6 + $0x14] sm:$0xf]
    %v451 = vld [vmem:[#allocation6 + $0x18] sm:$0xf]
    %v452 = vld [vmem:[#allocation6 + $0x1c] sm:$0xf]
    %v453 = vld [vmem:[#allocation6 + $0x20] sm:$0xf]
    %v454 = vld [vmem:[#allocation6 + $0x24] sm:$0xf]
    %v455 = vld [vmem:[#allocation6 + $0x28] sm:$0xf]
    %v456 = vld [vmem:[#allocation6 + $0x2c] sm:$0xf]
    %v457 = vld [vmem:[#allocation6 + $0x30] sm:$0xf]
    %v458 = vld [vmem:[#allocation6 + $0x34] sm:$0xf]
    %v459 = vld [vmem:[#allocation6 + $0x38] sm:$0xf]
    %v460 = vld [vmem:[#allocation6 + $0x3c] sm:$0xf]
    %v461 = vld [vmem:[#allocation6 + $0x40] sm:$0xf]
    %v462 = vld [vmem:[#allocation6 + $0x44] sm:$0xf]
    %v463 = vld [vmem:[#allocation6 + $0x48] sm:$0xf]
    %v464 = vld [vmem:[#allocation6 + $0x4c] sm:$0xf]
    %v465 = vld [vmem:[#allocation6 + $0x50] sm:$0xf]
    %v466 = vld [vmem:[#allocation6 + $0x54] sm:$0xf]
    %v467 = vld [vmem:[#allocation6 + $0x58] sm:$0xf]
    %v468 = vld [vmem:[#allocation6 + $0x5c] sm:$0xf]
    %v469 = vld [vmem:[#allocation6 + $0x60] sm:$0xf]
    %v470 = vld [vmem:[#allocation6 + $0x64] sm:$0xf]
    %v471 = vld [vmem:[#allocation6 + $0x68] sm:$0xf]
    %v472 = vld [vmem:[#allocation6 + $0x6c] sm:$0xf]
    %v473 = vld [vmem:[#allocation6 + $0x70] sm:$0xf]
    %v474 = vld [vmem:[#allocation6 + $0x74] sm:$0xf]
    %v475 = vld [vmem:[#allocation6 + $0x78] sm:$0xf]
    %v476 = vld [vmem:[#allocation6 + $0x7c] sm:$0xf]
    %v477 = vpack.c.bf16 %v443, %v441
    %v478 = vpack.c.bf16 %v444, %v442
    %v479 = vld [vmem:[%s6] sm:$0x1]
    %v481 = vlaneseq
    %v482 = vshrl.u32 %v481, 7
    %v483 = vsub.s32 0, %v482
    %v484 = vrot.slane %v479, %v483
    %v518 = vunpack.c.l.b16 %v445
    %v519 = vunpack.c.l.b16 %v446
    %v520 = vunpack.c.l.b16 %v447
    %v521 = vunpack.c.l.b16 %v448
    %v522 = vunpack.c.l.b16 %v449
    %v523 = vunpack.c.l.b16 %v450
    %v524 = vunpack.c.l.b16 %v451
    %v525 = vunpack.c.l.b16 %v452
    %v526 = vunpack.c.l.b16 %v453
    %v527 = vunpack.c.l.b16 %v454
    %v528 = vunpack.c.l.b16 %v455
    %v529 = vunpack.c.l.b16 %v456
    %v530 = vunpack.c.l.b16 %v457
    %v531 = vunpack.c.l.b16 %v458
    %v532 = vunpack.c.l.b16 %v459
    %v533 = vunpack.c.l.b16 %v460
    %v534 = vunpack.c.l.b16 %v461
    %v535 = vunpack.c.l.b16 %v462
    %v536 = vunpack.c.l.b16 %v463
    %v537 = vunpack.c.l.b16 %v464
    %v538 = vunpack.c.l.b16 %v465
    %v539 = vunpack.c.l.b16 %v466
    %v540 = vunpack.c.l.b16 %v467
    %v541 = vunpack.c.l.b16 %v468
    %v542 = vunpack.c.l.b16 %v469
    %v543 = vunpack.c.l.b16 %v470
    %v544 = vunpack.c.l.b16 %v471
    %v545 = vunpack.c.l.b16 %v472
    %v546 = vunpack.c.l.b16 %v473
    %v547 = vunpack.c.l.b16 %v474
    %v548 = vunpack.c.l.b16 %v475
    %v549 = vunpack.c.l.b16 %v476
    %v550 = vpack.c.b16 %v519, %v518
    %v551 = vpack.c.b16 %v521, %v520
    %v552 = vpack.c.b16 %v523, %v522
    %v553 = vpack.c.b16 %v525, %v524
    %v554 = vpack.c.b16 %v527, %v526
    %v555 = vpack.c.b16 %v529, %v528
    %v556 = vpack.c.b16 %v531, %v530
    %v557 = vpack.c.b16 %v533, %v532
    %v558 = vpack.c.b16 %v535, %v534
    %v559 = vpack.c.b16 %v537, %v536
    %v560 = vpack.c.b16 %v539, %v538
    %v561 = vpack.c.b16 %v541, %v540
    %v562 = vpack.c.b16 %v543, %v542
    %v563 = vpack.c.b16 %v545, %v544
    %v564 = vpack.c.b16 %v547, %v546
    %v565 = vpack.c.b16 %v549, %v548
    %582 = vmatprep.subr.bf16.mxu0 0
    %583 = vmatpush1.bf16.msra.mxu0 %v550
    %584 = vmatprep.subr.bf16.mxu0 0
    %585 = vmatpush1.bf16.msra.mxu0 %v551
    %586 = vmatprep.subr.bf16.mxu0 0
    %587 = vmatpush1.bf16.msra.mxu0 %v552
    %588 = vmatprep.subr.bf16.mxu0 0
    %589 = vmatpush1.bf16.msra.mxu0 %v553
    %590 = vmatprep.subr.bf16.mxu0 0
    %591 = vmatpush1.bf16.msra.mxu0 %v554
    %592 = vmatprep.subr.bf16.mxu0 0
    %593 = vmatpush1.bf16.msra.mxu0 %v555
    %594 = vmatprep.subr.bf16.mxu0 0
    %595 = vmatpush1.bf16.msra.mxu0 %v556
    %596 = vmatprep.subr.bf16.mxu0 0
    %597 = vmatpush1.bf16.msra.mxu0 %v557
    %598 = vmatprep.subr.bf16.mxu0 0
    %599 = vmatpush1.bf16.msra.mxu0 %v558
    %600 = vmatprep.subr.bf16.mxu0 0
    %601 = vmatpush1.bf16.msra.mxu0 %v559
    %602 = vmatprep.subr.bf16.mxu0 0
    %603 = vmatpush1.bf16.msra.mxu0 %v560
    %604 = vmatprep.subr.bf16.mxu0 0
    %605 = vmatpush1.bf16.msra.mxu0 %v561
    %606 = vmatprep.subr.bf16.mxu0 0
    %607 = vmatpush1.bf16.msra.mxu0 %v562
    %608 = vmatprep.subr.bf16.mxu0 0
    %609 = vmatpush1.bf16.msra.mxu0 %v563
    %610 = vmatprep.subr.bf16.mxu0 0
    %611 = vmatpush1.bf16.msra.mxu0 %v564
    %612 = vmatprep.subr.bf16.mxu0 0
    %613 = vmatpush1.bf16.msra.mxu0 %v565
    %614 = vmatprep.mubr.bf16.mxu0 %v478
    %615 = vmatmul.mubr.bf16.gmra.mrb[0].mxu0 %v477
    %v616 = vpop.f32.mrb[0].mxu0
    %v617 = vadd.f32 %v484, %v616
    %v618 = vpop.f32.mrb[0].mxu0
    %v619 = vpop.f32.mrb[0].mxu0
    %v620 = vadd.f32 %v484, %v619
    %v621 = vpop.f32.mrb[0].mxu0
    %622 = vdwg.mxu0
    %v623 = vmax.f32 %v617, 0.0
    %v624 = vmax.f32 %v620, 0.0
    %v625 = vld [vmem:[%s7] sm:$0xf]
    %v626 = vld [vmem:[%s7 + $0x4] sm:$0xf]
    %v627 = vld [vmem:[%s7 + $0x8] sm:$0xf]
    %v628 = vld [vmem:[%s7 + $0xc] sm:$0xf]
    %v629 = vld [vmem:[%s7 + $0x10] sm:$0xf]
    %v630 = vld [vmem:[%s7 + $0x14] sm:$0xf]
    %v631 = vld [vmem:[%s7 + $0x18] sm:$0xf]
    %v632 = vld [vmem:[%s7 + $0x1c] sm:$0xf]
    %v633 = vld [vmem:[%s7 + $0x20] sm:$0xf]
    %v634 = vld [vmem:[%s7 + $0x24] sm:$0xf]
    %v635 = vld [vmem:[%s7 + $0x28] sm:$0xf]
    %v636 = vld [vmem:[%s7 + $0x2c] sm:$0xf]
    %v637 = vld [vmem:[%s7 + $0x30] sm:$0xf]
    %v638 = vld [vmem:[%s7 + $0x34] sm:$0xf]
    %v639 = vld [vmem:[%s7 + $0x38] sm:$0xf]
    %v640 = vld [vmem:[%s7 + $0x3c] sm:$0xf]
    %v641 = vpack.c.bf16 %v624, %v623
    %v642 = vld [vmem:[%s8] sm:$0x1]
    %v644 = vlaneseq
    %v645 = vshrl.u32 %v644, 7
    %v646 = vsub.s32 0, %v645
    %v647 = vrot.slane %v642, %v646
    %v665 = vunpack.c.l.b16 %v625
    %v666 = vunpack.c.l.b16 %v626
    %v667 = vunpack.c.l.b16 %v627
    %v668 = vunpack.c.l.b16 %v628
    %v669 = vunpack.c.l.b16 %v629
    %v670 = vunpack.c.l.b16 %v630
    %v671 = vunpack.c.l.b16 %v631
    %v672 = vunpack.c.l.b16 %v632
    %v673 = vunpack.c.l.b16 %v633
    %v674 = vunpack.c.l.b16 %v634
    %v675 = vunpack.c.l.b16 %v635
    %v676 = vunpack.c.l.b16 %v636
    %v677 = vunpack.c.l.b16 %v637
    %v678 = vunpack.c.l.b16 %v638
    %v679 = vunpack.c.l.b16 %v639
    %v680 = vunpack.c.l.b16 %v640
    %v681 = vpack.c.b16 %v666, %v665
    %v682 = vpack.c.b16 %v668, %v667
    %v683 = vpack.c.b16 %v670, %v669
    %v684 = vpack.c.b16 %v672, %v671
    %v685 = vpack.c.b16 %v674, %v673
    %v686 = vpack.c.b16 %v676, %v675
    %v687 = vpack.c.b16 %v678, %v677
    %v688 = vpack.c.b16 %v680, %v679
    %697 = vmatprep.subr.bf16.mxu0 0
    %698 = vmatpush1.bf16.msra.mxu0 %v681
    %699 = vmatprep.subr.bf16.mxu0 0
    %700 = vmatpush1.bf16.msra.mxu0 %v682
    %701 = vmatprep.subr.bf16.mxu0 0
    %702 = vmatpush1.bf16.msra.mxu0 %v683
    %703 = vmatprep.subr.bf16.mxu0 0
    %704 = vmatpush1.bf16.msra.mxu0 %v684
    %705 = vmatprep.subr.bf16.mxu0 0
    %706 = vmatpush1.bf16.msra.mxu0 %v685
    %707 = vmatprep.subr.bf16.mxu0 0
    %708 = vmatpush1.bf16.msra.mxu0 %v686
    %709 = vmatprep.subr.bf16.mxu0 0
    %710 = vmatpush1.bf16.msra.mxu0 %v687
    %711 = vmatprep.subr.bf16.mxu0 0
    %712 = vmatpush1.bf16.msra.mxu0 %v688
    %713 = vmatprep.subr.bf16.mxu0 0
    %714 = vmatpush1.bf16.msra.mxu0 0
    %715 = vmatprep.subr.bf16.mxu0 0
    %716 = vmatpush1.bf16.msra.mxu0 0
    %717 = vmatprep.subr.bf16.mxu0 0
    %718 = vmatpush1.bf16.msra.mxu0 0
    %719 = vmatprep.subr.bf16.mxu0 0
    %720 = vmatpush1.bf16.msra.mxu0 0
    %721 = vmatprep.subr.bf16.mxu0 0
    %722 = vmatpush1.bf16.msra.mxu0 0
    %723 = vmatprep.subr.bf16.mxu0 0
    %724 = vmatpush1.bf16.msra.mxu0 0
    %725 = vmatprep.subr.bf16.mxu0 0
    %726 = vmatpush1.bf16.msra.mxu0 0
    %727 = vmatprep.subr.bf16.mxu0 0
    %728 = vmatpush1.bf16.msra.mxu0 0
    %729 = vmatprep.mubr.bf16.mxu0 0
    %730 = vmatmul.mubr.bf16.gmra.mrb[0].mxu0 %v641
    %v731 = vpop.f32.mrb[0].mxu0
    %v732 = vadd.f32 %v647, %v731
    %v733 = vpop.f32.mrb[0].mxu0
    %v734 = vpop.f32.mrb[0].mxu0
    %v735 = vadd.f32 %v647, %v734
    %v736 = vpop.f32.mrb[0].mxu0
    %737 = vdwg.mxu0
    %vm738 = vcmask 31744
    %739 = vst.msk [vmem:[%s9] sm:$0xff] %vm738, %v732
    %740 = vst.msk [vmem:[%s9 + $0x8] sm:$0xff] %vm738, %v735
    // Predicated region
    $region50: #{tpu_custom_call.1} parent=1 // pred_check
      _
    $region51: #{tpu_custom_call.1} parent=1 // pred_check_branch
      %742 = sbr.rel (0) target = $region53
    $region52: #{tpu_custom_call.1} parent=1 // pred_region
      _
    $region53: #{tpu_custom_call.1} parent=1 // pred_fallthru
      _
    // Predicated region
    $region54: #{tpu_custom_call.1} parent=1 // pred_check
      _
    $region55: #{tpu_custom_call.1} parent=1 // pred_check_branch
      %744 = sbr.rel (0) target = $region57
    $region56: #{tpu_custom_call.1} parent=1 // pred_region
      _
    $region57: #{tpu_custom_call.1} parent=1 // pred_fallthru
      _
    %745 = vsyncpa [#allocation3], 1
    %746 = vsyncpa [#allocation5], 1

</llo_original>
